<compile_context>
chip_gen: v7x
topology: tpu7x:2x2x1
jax: 0.10.0
libtpu: 0.0.40
codegen_flags: <defaults>
</compile_context>

<pallas_src>
import functools

import jax
import jax.numpy as jnp
from jax.experimental import pallas as pl
from jax.experimental.pallas import tpu as pltpu

BN_EPS = 1e-5
LRELU_SLOPE = 0.1
LANE = 128            # pad Cout to a multiple of the lane width -> unmasked, lane-dense stores
_MIB = 1024 * 1024


def _round_up(x, m):
    return ((x + m - 1) // m) * m


# ---------------------------------------------------------------------------
# Pass 1: conv-as-matmul + per-tile BN partial statistics
# ---------------------------------------------------------------------------
def _conv_stats_kernel(patches_ref, w_ref, y_ref, stats_ref):
    # patches_ref: [TILE_P, K]     bf16 (K = Cin*kh*kw)
    # w_ref:       [K, Cpad]       bf16 (zero-padded output channels)
    # y_ref:       [TILE_P, Cpad]  f32 conv output for this tile
    # stats_ref:   [8, Cpad]       f32; row 0 = sum_P(y), row 1 = sum_P(y*y)
    y = jnp.dot(patches_ref[...], w_ref[...], preferred_element_type=jnp.float32)
    y_ref[...] = y
    stats_ref[0:1, :] = jnp.sum(y, axis=0, keepdims=True)
    stats_ref[1:2, :] = jnp.sum(y * y, axis=0, keepdims=True)
    # rows 2..7 of stats_ref are padding for sublane alignment and are never read.


# ---------------------------------------------------------------------------
# Pass 2: BatchNorm (train-mode batch stats) + LeakyReLU, in place on y
# ---------------------------------------------------------------------------
def _bn_lrelu_kernel(y_ref, params_ref, out_ref, *, inv_n):
    # y_ref/out_ref: [TILE_P, Cpad] f32 (aliased buffers)
    # params_ref:    [4, Cpad] f32, rows = (sum, sumsq, gamma, beta)
    # inv_n:         1 / (N*Ho*Wo) baked in as a compile-time constant
    mean = params_ref[0:1, :] * inv_n
    ex2 = params_ref[1:2, :] * inv_n
    gamma = params_ref[2:3, :]
    beta = params_ref[3:4, :]
    var = jnp.maximum(ex2 - mean * mean, 0.0)          # guard tiny negative fp error
    scale = gamma * jax.lax.rsqrt(var + BN_EPS)        # [1, Cpad]; trivial per-tile work (EUP)
    shift = beta - mean * scale
    z = y_ref[...] * scale + shift
    out_ref[...] = jnp.maximum(z, LRELU_SLOPE * z)     # LeakyReLU(0.1)


# ---------------------------------------------------------------------------
# im2col (wrapper-side glue)
# ---------------------------------------------------------------------------
def _extract_patches_nchw(x, kernel_size=4, stride=2, padding=1):
    """NCHW -> [N*Ho*Wo, Cin*kh*kw], feature order (Cin, kh, kw) to match the
    flattening of a PyTorch OIHW conv weight.

    # TODO(synk): fuse patch extraction into pass 1 (padded NHWC tile reads + shifted
    # strided loads) to avoid materializing the ~4x-inflated im2col matrix in HBM;
    # for now patches are emitted directly in the (P, K) layout the kernel BlockSpec
    # consumes so XLA can fuse the gather with the HBM write.
    """
    n, cin, h, w = x.shape
    ho = (h + 2 * padding - kernel_size) // stride + 1
    wo = (w + 2 * padding - kernel_size) // stride + 1
    xp = jnp.pad(x, ((0, 0), (0, 0), (padding, padding), (padding, padding)))
    cols = []
    for kh in range(kernel_size):
        for kw in range(kernel_size):
            cols.append(xp[:, :, kh:kh + stride * ho:stride, kw:kw + stride * wo:stride])
    patches = jnp.stack(cols, axis=2)                       # [N, Cin, kh*kw, Ho, Wo]
    patches = patches.reshape(n, cin * kernel_size * kernel_size, ho, wo)
    patches = jnp.transpose(patches, (0, 2, 3, 1))          # [N, Ho, Wo, Cin*kh*kw]
    return patches.reshape(n * ho * wo, cin * kernel_size * kernel_size), (n, ho, wo)


def _choose_tile_p(p_rows, k_cols, cpad):
    # Target ~4 MiB of double-buffered per-tile traffic (bf16 patches + f32 y),
    # capped at 2048 rows so the tile also fits v7x's smaller VMEM comfortably.
    bytes_per_row = 2 * (k_cols * 2) + 2 * (cpad * 4)
    tile = (4 * _MIB) // max(bytes_per_row, 1)
    tile = max(256, min(2048, tile))
    tile = min(tile, _round_up(p_rows, 16))
    return max(16, _round_up(tile, 16))


def _vmem_limit_bytes(block_bytes):
    # Double-buffered blocks + headroom; stay below v7x's 64 MiB physical VMEM.
    return int(min(max(2 * block_bytes + 8 * _MIB, 32 * _MIB), 64 * _MIB))


# ---------------------------------------------------------------------------
# Public wrapper
# ---------------------------------------------------------------------------
def downsample_conv(x, conv_w, conv_b, bn_gamma, bn_beta,
                    kernel_size=4, stride=2, padding=1,
                    tile_p=None, compute_dtype=jnp.bfloat16):
    """Forward pass of DownSampleConv.

    x: [N, Cin, H, W] f32 (NCHW).  conv_w: [Cout, Cin, kh, kw] (PyTorch OIHW).
    conv_b is accepted for API parity but is mathematically a no-op under
    train-mode BatchNorm (the batch-mean subtraction cancels it exactly).
    Only the forward activation is computed; BatchNorm running_mean/var buffers
    are not updated.
    """
    del conv_b  # exactly cancelled by the BN mean subtraction

    cout, cin, kh, kw = conv_w.shape
    patches, (n, ho, wo) = _extract_patches_nchw(x, kernel_size, stride, padding)
    p_rows, k_cols = patches.shape

    cpad = _round_up(cout, LANE)                    # lane-dense output channel dim
    if tile_p is None:
        tile_p = _choose_tile_p(p_rows, k_cols, cpad)
    p_pad = _round_up(p_rows, tile_p)
    num_tiles = p_pad // tile_p

    # bf16 operands for the MXU (f32 accumulation inside the kernel). Zero row
    # padding is harmless for the BN statistics: the bias-free conv of an
    # all-zero patch row is exactly zero, so it contributes nothing to sum/sumsq.
    patches = patches.astype(compute_dtype)
    if p_pad != p_rows:
        patches = jnp.pad(patches, ((0, p_pad - p_rows), (0, 0)))
    w2d = conv_w.reshape(cout, cin * kh * kw).T.astype(jnp.float32)        # [K, Cout]
    w2d = jnp.pad(w2d, ((0, 0), (0, cpad - cout))).astype(compute_dtype)   # [K, Cpad]

    itemsize = jnp.dtype(compute_dtype).itemsize
    pass1_block_bytes = (2 * tile_p * k_cols * itemsize     # double-buffered patches
                         + k_cols * cpad * itemsize         # weights (resident)
                         + 2 * tile_p * cpad * 4            # double-buffered y
                         + 2 * 8 * cpad * 4)                # partial stats
    y, partial_stats = pl.pallas_call(
        _conv_stats_kernel,
        grid=(num_tiles,),
        in_specs=[
            pl.BlockSpec((tile_p, k_cols), lambda i: (i, 0)),
            pl.BlockSpec((k_cols, cpad), lambda i: (0, 0)),   # resident, loaded once
        ],
        out_specs=[
            pl.BlockSpec((tile_p, cpad), lambda i: (i, 0)),
            pl.BlockSpec((8, cpad), lambda i: (i, 0)),
        ],
        out_shape=[
            jax.ShapeDtypeStruct((p_pad, cpad), jnp.float32),
            jax.ShapeDtypeStruct((num_tiles * 8, cpad), jnp.float32),
        ],
        compiler_params=pltpu.CompilerParams(
            dimension_semantics=("parallel",),   # independent P tiles -> megacore-shardable
            vmem_limit_bytes=_vmem_limit_bytes(pass1_block_bytes)),
        cost_estimate=pl.CostEstimate(
            flops=2 * p_pad * k_cols * cpad,
            transcendentals=0,
            bytes_accessed=(p_pad * k_cols * itemsize + k_cols * cpad * itemsize
                            + p_pad * cpad * 4 + num_tiles * 8 * cpad * 4)),
    )(patches, w2d)

    # Combine the per-tile partial sums (tiny: num_tiles x Cpad) and stack with the
    # BN affine parameters; all per-element work stays inside pass 2.
    ps = partial_stats.reshape(num_tiles, 8, cpad)
    sums = jnp.sum(ps[:, 0, :], axis=0)
    sqs = jnp.sum(ps[:, 1, :], axis=0)
    gamma_pad = jnp.pad(bn_gamma.astype(jnp.float32), (0, cpad - cout),
                        constant_values=1.0)
    beta_pad = jnp.pad(bn_beta.astype(jnp.float32), (0, cpad - cout))
    params = jnp.stack([sums, sqs, gamma_pad, beta_pad], axis=0)           # [4, Cpad]

    pass2_block_bytes = 2 * tile_p * cpad * 4 * 2 + 4 * cpad * 4
    out_flat = pl.pallas_call(
        functools.partial(_bn_lrelu_kernel, inv_n=1.0 / float(p_rows)),
        grid=(num_tiles,),
        in_specs=[
            pl.BlockSpec((tile_p, cpad), lambda i: (i, 0)),
            pl.BlockSpec((4, cpad), lambda i: (0, 0)),        # resident, loaded once
        ],
        out_specs=pl.BlockSpec((tile_p, cpad), lambda i: (i, 0)),
        out_shape=jax.ShapeDtypeStruct((p_pad, cpad), jnp.float32),
        input_output_aliases={0: 0},              # normalize y in place (no extra HBM alloc)
        compiler_params=pltpu.CompilerParams(
            dimension_semantics=("parallel",),
            vmem_limit_bytes=_vmem_limit_bytes(pass2_block_bytes)),
        cost_estimate=pl.CostEstimate(
            flops=4 * p_pad * cpad,
            transcendentals=num_tiles * cpad,
            bytes_accessed=2 * p_pad * cpad * 4 + 4 * cpad * 4),
    )(y, params)

    # [P, Cpad] -> slice padding -> [N, Ho, Wo, Cout] -> NCHW
    out = out_flat[:p_rows, :cout].reshape(n, ho, wo, cout)
    return jnp.transpose(out, (0, 3, 1, 2))


# ---------------------------------------------------------------------------
# Pure-JAX reference (Conv2d(+bias) -> train-mode BN -> LeakyReLU(0.1))
# ---------------------------------------------------------------------------
def _reference(x, conv_w, conv_b, bn_gamma, bn_beta, stride=2, padding=1,
               conv_dtype=jnp.bfloat16):
    # Conv operands cast to `conv_dtype` to mirror the kernel's bf16 MXU inputs
    # (f32 accumulation), so the comparison tolerance can stay tight.
    y = jax.lax.conv_general_dilated(
        x.astype(conv_dtype), conv_w.astype(conv_dtype),
        window_strides=(stride, stride),
        padding=[(padding, padding), (padding, padding)],
        dimension_numbers=("NCHW", "OIHW", "NCHW"),
        preferred_element_type=jnp.float32)
    y = y + conv_b.reshape(1, -1, 1, 1).astype(jnp.float32)
    mean = jnp.mean(y, axis=(0, 2, 3), keepdims=True)
    var = jnp.mean((y - mean) ** 2, axis=(0, 2, 3), keepdims=True)
    y = (y - mean) * jax.lax.rsqrt(var + BN_EPS)
    y = y * bn_gamma.reshape(1, -1, 1, 1) + bn_beta.reshape(1, -1, 1, 1)
    return jnp.where(y >= 0, y, LRELU_SLOPE * y)


if __name__ == "__main__":
    key = jax.random.PRNGKey(0)
    k_x, k_w, k_b, k_g, k_be = jax.random.split(key, 5)

    N, Cin, H, W = 2, 4, 16, 16
    Cout, K = 8, 4

    x = jax.random.normal(k_x, (N, Cin, H, W), dtype=jnp.float32)
    fan_in = Cin * K * K
    bound = 1.0 / (fan_in ** 0.5)
    conv_w = jax.random.uniform(k_w, (Cout, Cin, K, K), minval=-bound, maxval=bound,
                                dtype=jnp.float32)
    conv_b = jax.random.uniform(k_b, (Cout,), minval=-bound, maxval=bound,
                                dtype=jnp.float32)
    bn_gamma = 1.0 + 0.1 * jax.random.normal(k_g, (Cout,), dtype=jnp.float32)
    bn_beta = 0.1 * jax.random.normal(k_be, (Cout,), dtype=jnp.float32)

    # tile_p=64 -> grid of 2 tiles over P = N*Ho*Wo = 128, exercising the tiled
    # pipeline and the cross-tile statistics combine even at toy sizes.
    fwd = jax.jit(functools.partial(downsample_conv, tile_p=64))
    out = fwd(x, conv_w, conv_b, bn_gamma, bn_beta)
    jax.block_until_ready(out)
    assert out.shape == (N, Cout, H // 2, W // 2), out.shape

    ref = _reference(x, conv_w, conv_b, bn_gamma, bn_beta)
    err = float(jnp.max(jnp.abs(out - ref)))
    assert err < 5e-3, f"max abs error {err}"
    print("KERNEL_OK")
</pallas_src>

<mosaic_0001>
module attributes {stable_mosaic.version = 11 : i64} {
  func.func @_conv_stats_kernel(%arg0: i32, %arg1: memref<64x64xbf16, #tpu.memory_space<vmem>>, %arg2: memref<64x128xbf16, #tpu.memory_space<vmem>>, %arg3: memref<64x128xf32, #tpu.memory_space<vmem>>, %arg4: memref<8x128xf32, #tpu.memory_space<vmem>>) attributes {dimension_semantics = [#tpu.dimension_semantics<parallel>], iteration_bounds = array<i64: 2>, scalar_prefetch = 0 : i64, scratch_operands = 0 : i64, tpu.core_type = #tpu.core_type<tc>, window_params = [{transform_indices = @transform_0, window_bounds = array<i64: 64, 64>}, {pipeline_mode = #tpu.pipeline_mode<synchronous>, transform_indices = @transform_1, window_bounds = array<i64: 64, 128>}, {transform_indices = @transform_2, window_bounds = array<i64: 64, 128>}, {transform_indices = @transform_3, window_bounds = array<i64: 8, 128>}]} {
    %c0 = arith.constant 0 : index
    %c0_0 = arith.constant 0 : index
    %0 = vector.load %arg1[%c0, %c0_0] : memref<64x64xbf16, #tpu.memory_space<vmem>>, vector<64x64xbf16>
    %c0_1 = arith.constant 0 : index
    %c0_2 = arith.constant 0 : index
    %1 = vector.load %arg2[%c0_1, %c0_2] : memref<64x128xbf16, #tpu.memory_space<vmem>>, vector<64x128xbf16>
    %cst = arith.constant dense<0.000000e+00> : vector<64x128xf32>
    %2 = tpu.matmul %0, %1, %cst {dimension_numbers = #tpu.dot_dimension_numbers<[1], [0], [0], [1], [0, 0, 1, 1], [], []>} : vector<64x64xbf16>, vector<64x128xbf16>, vector<64x128xf32> -> vector<64x128xf32>
    %c0_3 = arith.constant 0 : index
    %c0_4 = arith.constant 0 : index
    %3 = vector.load %arg3[%c0_3, %c0_4] : memref<64x128xf32, #tpu.memory_space<vmem>>, vector<64x128xf32>
    tpu.vector_store %arg3[%c0_3, %c0_4], %2 {strides = array<i32>} : memref<64x128xf32, #tpu.memory_space<vmem>>, vector<64x128xf32>,
    %cst_5 = arith.constant dense<0.000000e+00> : vector<128xf32>
    %4 = vector.multi_reduction <add>, %2, %cst_5 [0] : vector<64x128xf32> to vector<128xf32>
    %5 = vector.shape_cast %4 : vector<128xf32> to vector<1x128xf32>
    %c0_6 = arith.constant 0 : index
    %c0_7 = arith.constant 0 : index
    %6 = vector.load %arg4[%c0_6, %c0_7] : memref<8x128xf32, #tpu.memory_space<vmem>>, vector<1x128xf32>
    tpu.vector_store %arg4[%c0_6, %c0_7], %5 {strides = array<i32>} : memref<8x128xf32, #tpu.memory_space<vmem>>, vector<1x128xf32>,
    %7 = arith.mulf %2, %2 : vector<64x128xf32>
    %cst_8 = arith.constant dense<0.000000e+00> : vector<128xf32>
    %8 = vector.multi_reduction <add>, %7, %cst_8 [0] : vector<64x128xf32> to vector<128xf32>
    %9 = vector.shape_cast %8 : vector<128xf32> to vector<1x128xf32>
    %c1 = arith.constant 1 : index
    %c0_9 = arith.constant 0 : index
    %10 = vector.load %arg4[%c1, %c0_9] : memref<8x128xf32, #tpu.memory_space<vmem>>, vector<1x128xf32>
    tpu.vector_store %arg4[%c1, %c0_9], %9 {strides = array<i32>} : memref<8x128xf32, #tpu.memory_space<vmem>>, vector<1x128xf32>,
    return
  }
  func.func @transform_0(%arg0: i32) -> (i32, i32) {
    %c0_i32 = arith.constant 0 : i32
    %c0_i32_0 = arith.constant 0 : i32
    return %arg0, %c0_i32 : i32, i32
  }
  func.func @transform_1(%arg0: i32) -> (i32, i32) {
    %c0_i32 = arith.constant 0 : i32
    %c0_i32_0 = arith.constant 0 : i32
    %c0_i32_1 = arith.constant 0 : i32
    return %c0_i32, %c0_i32_0 : i32, i32
  }
  func.func @transform_2(%arg0: i32) -> (i32, i32) {
    %c0_i32 = arith.constant 0 : i32
    %c0_i32_0 = arith.constant 0 : i32
    return %arg0, %c0_i32 : i32, i32
  }
  func.func @transform_3(%arg0: i32) -> (i32, i32) {
    %c0_i32 = arith.constant 0 : i32
    %c0_i32_0 = arith.constant 0 : i32
    return %arg0, %c0_i32 : i32, i32
  }
}

module attributes {stable_mosaic.version = 11 : i64} {
  func.func @_bn_lrelu_kernel(%arg0: i32, %arg1: memref<64x128xf32, #tpu.memory_space<vmem>>, %arg2: memref<4x128xf32, #tpu.memory_space<vmem>>, %arg3: memref<64x128xf32, #tpu.memory_space<vmem>>) attributes {dimension_semantics = [#tpu.dimension_semantics<parallel>], iteration_bounds = array<i64: 2>, scalar_prefetch = 0 : i64, scratch_operands = 0 : i64, tpu.core_type = #tpu.core_type<tc>, window_params = [{transform_indices = @transform_0, window_bounds = array<i64: 64, 128>}, {pipeline_mode = #tpu.pipeline_mode<synchronous>, transform_indices = @transform_1, window_bounds = array<i64: 4, 128>}, {transform_indices = @transform_2, window_bounds = array<i64: 64, 128>}]} {
    %c0 = arith.constant 0 : index
    %c0_0 = arith.constant 0 : index
    %0 = vector.load %arg2[%c0, %c0_0] : memref<4x128xf32, #tpu.memory_space<vmem>>, vector<1x128xf32>
    %cst = arith.constant 7.812500e-03 : f32
    %1 = vector.broadcast %cst : f32 to vector<1x128xf32>
    %2 = arith.mulf %0, %1 : vector<1x128xf32>
    %c1 = arith.constant 1 : index
    %c0_1 = arith.constant 0 : index
    %3 = vector.load %arg2[%c1, %c0_1] : memref<4x128xf32, #tpu.memory_space<vmem>>, vector<1x128xf32>
    %cst_2 = arith.constant 7.812500e-03 : f32
    %4 = vector.broadcast %cst_2 : f32 to vector<1x128xf32>
    %5 = arith.mulf %3, %4 : vector<1x128xf32>
    %c2 = arith.constant 2 : index
    %c0_3 = arith.constant 0 : index
    %6 = vector.load %arg2[%c2, %c0_3] : memref<4x128xf32, #tpu.memory_space<vmem>>, vector<1x128xf32>
    %c3 = arith.constant 3 : index
    %c0_4 = arith.constant 0 : index
    %7 = vector.load %arg2[%c3, %c0_4] : memref<4x128xf32, #tpu.memory_space<vmem>>, vector<1x128xf32>
    %8 = arith.mulf %2, %2 : vector<1x128xf32>
    %9 = arith.subf %5, %8 : vector<1x128xf32>
    %cst_5 = arith.constant 0.000000e+00 : f32
    %10 = vector.broadcast %cst_5 : f32 to vector<1x128xf32>
    %11 = arith.maximumf %9, %10 : vector<1x128xf32>
    %cst_6 = arith.constant 9.99999974E-6 : f32
    %12 = vector.broadcast %cst_6 : f32 to vector<1x128xf32>
    %13 = arith.addf %11, %12 : vector<1x128xf32>
    %14 = math.rsqrt %13 : vector<1x128xf32>
    %15 = arith.mulf %6, %14 : vector<1x128xf32>
    %16 = arith.mulf %2, %15 : vector<1x128xf32>
    %17 = arith.subf %7, %16 : vector<1x128xf32>
    %c0_7 = arith.constant 0 : index
    %c0_8 = arith.constant 0 : index
    %18 = vector.load %arg1[%c0_7, %c0_8] : memref<64x128xf32, #tpu.memory_space<vmem>>, vector<64x128xf32>
    %19 = vector.broadcast %15 : vector<1x128xf32> to vector<64x128xf32>
    %20 = arith.mulf %18, %19 : vector<64x128xf32>
    %21 = vector.broadcast %17 : vector<1x128xf32> to vector<64x128xf32>
    %22 = arith.addf %20, %21 : vector<64x128xf32>
    %cst_9 = arith.constant 1.000000e-01 : f32
    %23 = vector.broadcast %cst_9 : f32 to vector<64x128xf32>
    %24 = arith.mulf %23, %22 : vector<64x128xf32>
    %25 = arith.maximumf %22, %24 : vector<64x128xf32>
    %c0_10 = arith.constant 0 : index
    %c0_11 = arith.constant 0 : index
    %26 = vector.load %arg3[%c0_10, %c0_11] : memref<64x128xf32, #tpu.memory_space<vmem>>, vector<64x128xf32>
    tpu.vector_store %arg3[%c0_10, %c0_11], %25 {strides = array<i32>} : memref<64x128xf32, #tpu.memory_space<vmem>>, vector<64x128xf32>,
    return
  }
  func.func @transform_0(%arg0: i32) -> (i32, i32) {
    %c0_i32 = arith.constant 0 : i32
    %c0_i32_0 = arith.constant 0 : i32
    return %arg0, %c0_i32 : i32, i32
  }
  func.func @transform_1(%arg0: i32) -> (i32, i32) {
    %c0_i32 = arith.constant 0 : i32
    %c0_i32_0 = arith.constant 0 : i32
    %c0_i32_1 = arith.constant 0 : i32
    return %c0_i32, %c0_i32_0 : i32, i32
  }
  func.func @transform_2(%arg0: i32) -> (i32, i32) {
    %c0_i32 = arith.constant 0 : i32
    %c0_i32_0 = arith.constant 0 : i32
    return %arg0, %c0_i32 : i32, i32
  }
}

</mosaic_0001>

<llo_original>
// kernel: downsample_conv.3
$region0: #{downsample_conv.3}
  #allocation0 [shape = 'u32[]', space=smem, size = 0x4, offset = 0x4, fixed_abs, tag = 'smem constant byte address 0x4 - core index']
  #allocation1 [shape = 'u32[144,128]{1,0:T(1,128)}', space=vmem, size = 0x12000, scoped, tag = 'internal scratch']
  %s0 = inlined_call_operand.vmem [shape: f32[128,128], index: 0, kind: input, shape index: {}, may-alias: {0,2}]
  %s1 = inlined_call_operand.vmem [shape: f32[4,128], index: 1, kind: input, shape index: {}]
  %s2 = inlined_call_operand.vmem [shape: f32[128,128], index: 2, kind: output, shape index: {}, may-alias: {0,2}]
  %s3 = sld [smem:[#allocation0]]
  $region41: #{downsample_conv.3} parent=0
    _
  %s5 = ssub.s32 1, %s3
  %s6 = scalar_select 0, %s5, %s3
  loop: start=0, step=1, limit=4
  $region2: #{downsample_conv.3} parent=0 // loop_pre_header
    _
  $region3: #{downsample_conv.3} parent=0 // loop_header
    %s8 = sphi 0, %s12
    %p9 = scmp.ge.s32.totalorder %s8, 4
    %s18 = sphi 0, %s20
    %s21 = sphi 0, %s18
    %s22 = sphi 0, %s21
    %s38 = sphi 0, %s22
    %s42 = sphi 0, %s42
    %s44 = sphi 0, %s42
    %s45 = sphi 0, %s44
    %s59 = sphi 0, %s45
    %s65 = sphi 0, %s67
    %s68 = sphi 0, %s65
    %s69 = sphi 0, %s68
    %s85 = sphi 0, %s69
  $region4: #{downsample_conv.3} parent=0 // loop_header_branch
    %11 = sbr.rel (%p9) target = $region8
  $region5: #{downsample_conv.3} parent=0 // loop_body
    %s13 = ssub.s32 %s8, 1
    %s14 = ssub.s32 %s8, 2
    %s15 = sadd.s32 %s8, 1
    %s16 = ssub.s32 %s8, %s15
    %p17 = scmp.eq.s32.totalorder %s16, 0
    %s19 = sadd.s32 %s18, 1
    %s20 = scalar_select %p17, %s18, %s19
    %p23 = pneg %p17
    %p24 = scmp.eq.s32.totalorder %s8, 1
    %p25 = por %p23, %p24
    %p26 = scmp.ne.s32.totalorder %s18, %s21
    %p27 = scmp.eq.s32.totalorder %s8, 0
    %p28 = por %p26, %p27
    %p29 = scmp.ne.s32.totalorder %s18, %s21
    %p30 = scmp.eq.s32.totalorder %s13, 1
    %p31 = por %p29, %p30
    %p32 = scmp.ne.s32.totalorder %s21, %s22
    %p33 = scmp.eq.s32.totalorder %s13, 0
    %p34 = por %p32, %p33
    %p35 = scmp.ne.s32.totalorder %s21, %s22
    %p36 = scmp.eq.s32.totalorder %s14, 1
    %p37 = por %p35, %p36
    %p39 = scmp.ne.s32.totalorder %s22, %s38
    %p40 = scmp.eq.s32.totalorder %s14, 0
    %p41 = por %p39, %p40
    %s43 = sadd.s32 %s42, 1
    %p46 = scmp.eq.s32.totalorder %s8, 1
    %p47 = scmp.ne.s32.totalorder %s42, %s44
    %p48 = scmp.eq.s32.totalorder %s8, 0
    %p49 = por %p47, %p48
    %p50 = scmp.ne.s32.totalorder %s42, %s44
    %p51 = scmp.eq.s32.totalorder %s13, 1
    %p52 = por %p50, %p51
    %p53 = scmp.ne.s32.totalorder %s44, %s45
    %p54 = scmp.eq.s32.totalorder %s13, 0
    %p55 = por %p53, %p54
    %p56 = scmp.ne.s32.totalorder %s44, %s45
    %p57 = scmp.eq.s32.totalorder %s14, 1
    %p58 = por %p56, %p57
    %p60 = scmp.ne.s32.totalorder %s45, %s59
    %p61 = scmp.eq.s32.totalorder %s14, 0
    %p62 = por %p60, %p61
    %s63 = ssub.s32 %s8, %s15
    %p64 = scmp.eq.s32.totalorder %s63, 0
    %s66 = sadd.s32 %s65, 1
    %s67 = scalar_select %p64, %s65, %s66
    %p70 = pneg %p64
    %p71 = scmp.eq.s32.totalorder %s8, 1
    %p72 = por %p70, %p71
    %p73 = scmp.ne.s32.totalorder %s65, %s68
    %p74 = scmp.eq.s32.totalorder %s8, 0
    %p75 = por %p73, %p74
    %p76 = scmp.ne.s32.totalorder %s65, %s68
    %p77 = scmp.eq.s32.totalorder %s13, 1
    %p78 = por %p76, %p77
    %p79 = scmp.ne.s32.totalorder %s68, %s69
    %p80 = scmp.eq.s32.totalorder %s13, 0
    %p81 = por %p79, %p80
    %p82 = scmp.ne.s32.totalorder %s68, %s69
    %p83 = scmp.eq.s32.totalorder %s14, 1
    %p84 = por %p82, %p83
    %p86 = scmp.ne.s32.totalorder %s69, %s85
    %p87 = scmp.eq.s32.totalorder %s14, 0
    %p88 = por %p86, %p87
    %p89 = scmp.le.s32.totalorder 1, %s8
    %p90 = scmp.lt.s32.totalorder %s8, 3
    %p91 = pnand %p89, %p90
    %p92 = pneg %p91
    // Predicated region
    $region9: #{downsample_conv.3} parent=5 // pred_check
      _
    $region10: #{downsample_conv.3} parent=5 // pred_check_branch
      %94 = sbr.rel (%p91) target = $region12
    $region11: #{downsample_conv.3} parent=5 // pred_region
      %s95 = ssub.s32 %s8, 1
      // Predicated region
      $region13: #{downsample_conv.3} parent=11 // pred_check
        %p96 = pneg %p55
      $region14: #{downsample_conv.3} parent=11 // pred_check_branch
        %98 = sbr.rel (%p96) target = $region16
      $region15: #{downsample_conv.3} parent=11 // pred_region
        _
      $region16: #{downsample_conv.3} parent=11 // pred_fallthru
        _
    $region12: #{downsample_conv.3} parent=5 // pred_fallthru
      _
    %p99 = scmp.lt.s32.totalorder %s8, 2
    // Predicated region
    $region17: #{downsample_conv.3} parent=5 // pred_check
      %p100 = pneg %p99
    $region18: #{downsample_conv.3} parent=5 // pred_check_branch
      %102 = sbr.rel (%p100) target = $region20
    $region19: #{downsample_conv.3} parent=5 // pred_region
      // Predicated region
      $region21: #{downsample_conv.3} parent=19 // pred_check
        %p103 = pneg %p28
      $region22: #{downsample_conv.3} parent=19 // pred_check_branch
        %105 = sbr.rel (%p103) target = $region24
      $region23: #{downsample_conv.3} parent=19 // pred_region
        %s106 = smul.u32 8, %s8
        %p107 = scmp.lt.s32.totalorder %s106, 15
        %s108 = scalar_select %p107, %s106, 15
        %s109 = smul.addr %s108, 8
        %s110 = scalar_lea.vmem %s0, %s109
        %s111 = smul.u32 8, %s8
      $region24: #{downsample_conv.3} parent=19 // pred_fallthru
        _
    $region20: #{downsample_conv.3} parent=5 // pred_fallthru
      _
    %p112 = scmp.le.s32.totalorder 1, %s8
    %p113 = scmp.lt.s32.totalorder %s8, 3
    %p114 = pnand %p112, %p113
    %p115 = pneg %p114
    // Predicated region
    $region25: #{downsample_conv.3} parent=5 // pred_check
      _
    $region26: #{downsample_conv.3} parent=5 // pred_check_branch
      %117 = sbr.rel (%p114) target = $region28
    $region27: #{downsample_conv.3} parent=5 // pred_region
      %s118 = ssub.s32 %s8, 1
      %s119 = smul.u32 8, %s13
      %p120 = scmp.lt.s32.totalorder %s119, 15
      %s121 = scalar_select %p120, %s119, 15
      %s122 = smul.addr %s121, 8
      %s123 = scalar_lea.vmem %s0, %s122
      %p124 = pneg %p34
      %p125 = pneg %p31
      %p126 = pneg %p55
      %p127 = pneg %p52
      %p128 = pneg %p81
      %p129 = pneg %p78
      %s130 = smul.u32 8, %s13
      %p131 = scmp.lt.s32.totalorder %s130, 15
      %s132 = scalar_select %p131, %s130, 15
      %s133 = smul.addr %s132, 8
      %s134 = scalar_lea.vmem %s2, %s133
      %s135 = smul.u32 8, %s13
      %p136 = scmp.lt.s32.totalorder %s135, 15
      %s137 = scalar_select %p136, %s135, 15
      %s138 = smul.addr %s137, 8
      %s139 = scalar_lea.vmem %s0, %s138
      %s140 = smul.u32 8, %s13
      %s141 = smul.u32 8, %s13
      %p142 = scmp.lt.s32.totalorder %s141, 15
      %s143 = scalar_select %p142, %s141, 15
      %s144 = smul.addr %s143, 8
      %s145 = scalar_lea.vmem %s2, %s144
      %s146 = smul.u32 8, %s13
      %v147 = vld [vmem:[%s1] sm:$0x1]
      %v148 = vmul.f32 %v147, 0.0078125
      %v149 = vld [vmem:[%s1 + $0x1] sm:$0x1]
      %v150 = vmul.f32 %v149, 0.0078125
      %v151 = vld [vmem:[%s1 + $0x2] sm:$0x1]
      %v152 = vld [vmem:[%s1 + $0x3] sm:$0x1]
      %v153 = vmul.f32 %v148, %v148
      %v154 = vsub.f32 %v150, %v153
      %v155 = vmax.f32 %v154, 0.0
      %v156 = vadd.f32 %v155, 1e-05
      %v157 = vrsqrt.pop %v156
      %v158 = vmul.f32 %v151, %v157
      %v159 = vmul.f32 %v148, %v158
      %v160 = vsub.f32 %v152, %v159
      %v161 = vld [vmem:[%s139] sm:$0xff]
      %v162 = vld [vmem:[%s139 + $0x8] sm:$0xff]
      %v163 = vld [vmem:[%s139 + $0x10] sm:$0xff]
      %v164 = vld [vmem:[%s139 + $0x18] sm:$0xff]
      %v165 = vld [vmem:[%s139 + $0x20] sm:$0xff]
      %v166 = vld [vmem:[%s139 + $0x28] sm:$0xff]
      %v167 = vld [vmem:[%s139 + $0x30] sm:$0xff]
      %v168 = vld [vmem:[%s139 + $0x38] sm:$0xff]
      %v169 = vlaneseq
      %v170 = vshrl.u32 %v169, 7
      %v171 = vsub.s32 0, %v170
      %v172 = vrot.slane %v158, %v171
      %v173 = vmul.f32 %v161, %v172
      %v174 = vmul.f32 %v162, %v172
      %v175 = vmul.f32 %v163, %v172
      %v176 = vmul.f32 %v164, %v172
      %v177 = vmul.f32 %v165, %v172
      %v178 = vmul.f32 %v166, %v172
      %v179 = vmul.f32 %v167, %v172
      %v180 = vmul.f32 %v168, %v172
      %v181 = vlaneseq
      %v182 = vshrl.u32 %v181, 7
      %v183 = vsub.s32 0, %v182
      %v184 = vrot.slane %v160, %v183
      %v185 = vadd.f32 %v173, %v184
      %v186 = vadd.f32 %v174, %v184
      %v187 = vadd.f32 %v175, %v184
      %v188 = vadd.f32 %v176, %v184
      %v189 = vadd.f32 %v177, %v184
      %v190 = vadd.f32 %v178, %v184
      %v191 = vadd.f32 %v179, %v184
      %v192 = vadd.f32 %v180, %v184
      %v193 = vmul.f32 %v185, 0.1
      %v194 = vmul.f32 %v186, 0.1
      %v195 = vmul.f32 %v187, 0.1
      %v196 = vmul.f32 %v188, 0.1
      %v197 = vmul.f32 %v189, 0.1
      %v198 = vmul.f32 %v190, 0.1
      %v199 = vmul.f32 %v191, 0.1
      %v200 = vmul.f32 %v192, 0.1
      %v201 = vmax.f32 %v185, %v193
      %v202 = vmax.f32 %v186, %v194
      %v203 = vmax.f32 %v187, %v195
      %v204 = vmax.f32 %v188, %v196
      %v205 = vmax.f32 %v189, %v197
      %v206 = vmax.f32 %v190, %v198
      %v207 = vmax.f32 %v191, %v199
      %v208 = vmax.f32 %v192, %v200
      %209 = vst [vmem:[%s145] sm:$0xff] %v201
      %210 = vst [vmem:[%s145 + $0x8] sm:$0xff] %v202
      %211 = vst [vmem:[%s145 + $0x10] sm:$0xff] %v203
      %212 = vst [vmem:[%s145 + $0x18] sm:$0xff] %v204
      %213 = vst [vmem:[%s145 + $0x20] sm:$0xff] %v205
      %214 = vst [vmem:[%s145 + $0x28] sm:$0xff] %v206
      %215 = vst [vmem:[%s145 + $0x30] sm:$0xff] %v207
      %216 = vst [vmem:[%s145 + $0x38] sm:$0xff] %v208
      %s217 = smul.u32 8, %s13
      %p218 = scmp.lt.s32.totalorder %s217, 15
      %s219 = scalar_select %p218, %s217, 15
      %s220 = smul.addr %s219, 8
      %s221 = scalar_lea.vmem %s2, %s220
      // Predicated region
      $region29: #{downsample_conv.3} parent=27 // pred_check
        %p222 = pneg %p78
      $region30: #{downsample_conv.3} parent=27 // pred_check_branch
        %224 = sbr.rel (%p222) target = $region32
      $region31: #{downsample_conv.3} parent=27 // pred_region
        %s225 = smul.u32 8, %s13
      $region32: #{downsample_conv.3} parent=27 // pred_fallthru
        _
    $region28: #{downsample_conv.3} parent=5 // pred_fallthru
      _
    %p226 = scmp.le.s32.totalorder 2, %s8
    // Predicated region
    $region33: #{downsample_conv.3} parent=5 // pred_check
      %p227 = pneg %p226
    $region34: #{downsample_conv.3} parent=5 // pred_check_branch
      %229 = sbr.rel (%p227) target = $region36
    $region35: #{downsample_conv.3} parent=5 // pred_region
      %s230 = ssub.s32 %s8, 2
      // Predicated region
      $region37: #{downsample_conv.3} parent=35 // pred_check
        %p231 = pneg %p84
      $region38: #{downsample_conv.3} parent=35 // pred_check_branch
        %233 = sbr.rel (%p231) target = $region40
      $region39: #{downsample_conv.3} parent=35 // pred_region
        %s234 = smul.u32 8, %s14
        %p235 = scmp.lt.s32.totalorder %s234, 15
        %s236 = scalar_select %p235, %s234, 15
        %s237 = smul.addr %s236, 8
        %s238 = scalar_lea.vmem %s2, %s237
      $region40: #{downsample_conv.3} parent=35 // pred_fallthru
        _
    $region36: #{downsample_conv.3} parent=5 // pred_fallthru
      _
  $region6: #{downsample_conv.3} parent=0 // loop_footer
    %s12 = sadd.s32 1, %s8
  $region7: #{downsample_conv.3} parent=0 // loop_footer_branch
    %7 = sbr.rel target = $region3
  $region8: #{downsample_conv.3} parent=0 // loop_exit
    _

// kernel: downsample_conv.2
$region0: #{downsample_conv.2}
  #allocation0 [shape = 'u32[]', space=smem, size = 0x4, offset = 0x4, fixed_abs, tag = 'smem constant byte address 0x4 - core index']
  #allocation1 [shape = 'u32[144,128]{1,0:T(1,128)}', space=vmem, size = 0x12000, scoped, tag = 'internal scratch']
  %s0 = inlined_call_operand.vmem [shape: bf16[128,64], index: 0, kind: input, shape index: {}]
  %s1 = inlined_call_operand.vmem [shape: bf16[64,128], index: 1, kind: input, shape index: {}]
  %s2 = inlined_call_operand.vmem [shape: f32[128,128], index: 2, kind: output, shape index: {0}]
  %s3 = inlined_call_operand.vmem [shape: f32[16,128], index: 3, kind: output, shape index: {1}]
  %4 = xla_tuple %s2, %s3
  %s5 = sld [smem:[#allocation0]]
  $region49: #{downsample_conv.2} parent=0
    _
  %s7 = ssub.s32 1, %s5
  %s8 = scalar_select 0, %s7, %s5
  loop: start=0, step=1, limit=4
  $region2: #{downsample_conv.2} parent=0 // loop_pre_header
    _
  $region3: #{downsample_conv.2} parent=0 // loop_header
    %s10 = sphi 0, %s14
    %p11 = scmp.ge.s32.totalorder %s10, 4
    %s20 = sphi 0, %s22
    %s23 = sphi 0, %s20
    %s24 = sphi 0, %s23
    %s40 = sphi 0, %s24
    %s44 = sphi 0, %s44
    %s46 = sphi 0, %s44
    %s47 = sphi 0, %s46
    %s61 = sphi 0, %s47
    %s67 = sphi 0, %s69
    %s70 = sphi 0, %s67
    %s71 = sphi 0, %s70
    %s87 = sphi 0, %s71
    %s93 = sphi 0, %s95
    %s96 = sphi 0, %s93
    %s97 = sphi 0, %s96
    %s113 = sphi 0, %s97
  $region4: #{downsample_conv.2} parent=0 // loop_header_branch
    %13 = sbr.rel (%p11) target = $region8
  $region5: #{downsample_conv.2} parent=0 // loop_body
    %s15 = ssub.s32 %s10, 1
    %s16 = ssub.s32 %s10, 2
    %s17 = sadd.s32 %s10, 1
    %s18 = ssub.s32 %s10, %s17
    %p19 = scmp.eq.s32.totalorder %s18, 0
    %s21 = sadd.s32 %s20, 1
    %s22 = scalar_select %p19, %s20, %s21
    %p25 = pneg %p19
    %p26 = scmp.eq.s32.totalorder %s10, 1
    %p27 = por %p25, %p26
    %p28 = scmp.ne.s32.totalorder %s20, %s23
    %p29 = scmp.eq.s32.totalorder %s10, 0
    %p30 = por %p28, %p29
    %p31 = scmp.ne.s32.totalorder %s20, %s23
    %p32 = scmp.eq.s32.totalorder %s15, 1
    %p33 = por %p31, %p32
    %p34 = scmp.ne.s32.totalorder %s23, %s24
    %p35 = scmp.eq.s32.totalorder %s15, 0
    %p36 = por %p34, %p35
    %p37 = scmp.ne.s32.totalorder %s23, %s24
    %p38 = scmp.eq.s32.totalorder %s16, 1
    %p39 = por %p37, %p38
    %p41 = scmp.ne.s32.totalorder %s24, %s40
    %p42 = scmp.eq.s32.totalorder %s16, 0
    %p43 = por %p41, %p42
    %s45 = sadd.s32 %s44, 1
    %p48 = scmp.eq.s32.totalorder %s10, 1
    %p49 = scmp.ne.s32.totalorder %s44, %s46
    %p50 = scmp.eq.s32.totalorder %s10, 0
    %p51 = por %p49, %p50
    %p52 = scmp.ne.s32.totalorder %s44, %s46
    %p53 = scmp.eq.s32.totalorder %s15, 1
    %p54 = por %p52, %p53
    %p55 = scmp.ne.s32.totalorder %s46, %s47
    %p56 = scmp.eq.s32.totalorder %s15, 0
    %p57 = por %p55, %p56
    %p58 = scmp.ne.s32.totalorder %s46, %s47
    %p59 = scmp.eq.s32.totalorder %s16, 1
    %p60 = por %p58, %p59
    %p62 = scmp.ne.s32.totalorder %s47, %s61
    %p63 = scmp.eq.s32.totalorder %s16, 0
    %p64 = por %p62, %p63
    %s65 = ssub.s32 %s10, %s17
    %p66 = scmp.eq.s32.totalorder %s65, 0
    %s68 = sadd.s32 %s67, 1
    %s69 = scalar_select %p66, %s67, %s68
    %p72 = pneg %p66
    %p73 = scmp.eq.s32.totalorder %s10, 1
    %p74 = por %p72, %p73
    %p75 = scmp.ne.s32.totalorder %s67, %s70
    %p76 = scmp.eq.s32.totalorder %s10, 0
    %p77 = por %p75, %p76
    %p78 = scmp.ne.s32.totalorder %s67, %s70
    %p79 = scmp.eq.s32.totalorder %s15, 1
    %p80 = por %p78, %p79
    %p81 = scmp.ne.s32.totalorder %s70, %s71
    %p82 = scmp.eq.s32.totalorder %s15, 0
    %p83 = por %p81, %p82
    %p84 = scmp.ne.s32.totalorder %s70, %s71
    %p85 = scmp.eq.s32.totalorder %s16, 1
    %p86 = por %p84, %p85
    %p88 = scmp.ne.s32.totalorder %s71, %s87
    %p89 = scmp.eq.s32.totalorder %s16, 0
    %p90 = por %p88, %p89
    %s91 = ssub.s32 %s10, %s17
    %p92 = scmp.eq.s32.totalorder %s91, 0
    %s94 = sadd.s32 %s93, 1
    %s95 = scalar_select %p92, %s93, %s94
    %p98 = pneg %p92
    %p99 = scmp.eq.s32.totalorder %s10, 1
    %p100 = por %p98, %p99
    %p101 = scmp.ne.s32.totalorder %s93, %s96
    %p102 = scmp.eq.s32.totalorder %s10, 0
    %p103 = por %p101, %p102
    %p104 = scmp.ne.s32.totalorder %s93, %s96
    %p105 = scmp.eq.s32.totalorder %s15, 1
    %p106 = por %p104, %p105
    %p107 = scmp.ne.s32.totalorder %s96, %s97
    %p108 = scmp.eq.s32.totalorder %s15, 0
    %p109 = por %p107, %p108
    %p110 = scmp.ne.s32.totalorder %s96, %s97
    %p111 = scmp.eq.s32.totalorder %s16, 1
    %p112 = por %p110, %p111
    %p114 = scmp.ne.s32.totalorder %s97, %s113
    %p115 = scmp.eq.s32.totalorder %s16, 0
    %p116 = por %p114, %p115
    %p117 = scmp.le.s32.totalorder 1, %s10
    %p118 = scmp.lt.s32.totalorder %s10, 3
    %p119 = pnand %p117, %p118
    %p120 = pneg %p119
    // Predicated region
    $region9: #{downsample_conv.2} parent=5 // pred_check
      _
    $region10: #{downsample_conv.2} parent=5 // pred_check_branch
      %122 = sbr.rel (%p119) target = $region12
    $region11: #{downsample_conv.2} parent=5 // pred_region
      %s123 = ssub.s32 %s10, 1
      // Predicated region
      $region13: #{downsample_conv.2} parent=11 // pred_check
        %p124 = pneg %p57
      $region14: #{downsample_conv.2} parent=11 // pred_check_branch
        %126 = sbr.rel (%p124) target = $region16
      $region15: #{downsample_conv.2} parent=11 // pred_region
        _
      $region16: #{downsample_conv.2} parent=11 // pred_fallthru
        _
    $region12: #{downsample_conv.2} parent=5 // pred_fallthru
      _
    %p127 = scmp.lt.s32.totalorder %s10, 2
    // Predicated region
    $region17: #{downsample_conv.2} parent=5 // pred_check
      %p128 = pneg %p127
    $region18: #{downsample_conv.2} parent=5 // pred_check_branch
      %130 = sbr.rel (%p128) target = $region20
    $region19: #{downsample_conv.2} parent=5 // pred_region
      // Predicated region
      $region21: #{downsample_conv.2} parent=19 // pred_check
        %p131 = pneg %p30
      $region22: #{downsample_conv.2} parent=19 // pred_check_branch
        %133 = sbr.rel (%p131) target = $region24
      $region23: #{downsample_conv.2} parent=19 // pred_region
        %s134 = smul.u32 8, %s10
        %p135 = scmp.lt.s32.totalorder %s134, 15
        %s136 = scalar_select %p135, %s134, 15
        %s137 = smul.addr %s136, 4
        %s138 = scalar_lea.vmem %s0, %s137
        %s139 = smul.u32 8, %s10
      $region24: #{downsample_conv.2} parent=19 // pred_fallthru
        _
    $region20: #{downsample_conv.2} parent=5 // pred_fallthru
      _
    %p140 = scmp.le.s32.totalorder 1, %s10
    %p141 = scmp.lt.s32.totalorder %s10, 3
    %p142 = pnand %p140, %p141
    %p143 = pneg %p142
    // Predicated region
    $region25: #{downsample_conv.2} parent=5 // pred_check
      _
    $region26: #{downsample_conv.2} parent=5 // pred_check_branch
      %145 = sbr.rel (%p142) target = $region28
    $region27: #{downsample_conv.2} parent=5 // pred_region
      %s146 = ssub.s32 %s10, 1
      %s147 = smul.u32 8, %s15
      %p148 = scmp.lt.s32.totalorder %s147, 15
      %s149 = scalar_select %p148, %s147, 15
      %s150 = smul.addr %s149, 4
      %s151 = scalar_lea.vmem %s0, %s150
      %p152 = pneg %p36
      %p153 = pneg %p33
      %p154 = pneg %p57
      %p155 = pneg %p54
      %p156 = pneg %p83
      %p157 = pneg %p80
      %s158 = smul.u32 8, %s15
      %p159 = scmp.lt.s32.totalorder %s158, 15
      %s160 = scalar_select %p159, %s158, 15
      %s161 = smul.addr %s160, 8
      %s162 = scalar_lea.vmem %s2, %s161
      %p163 = pneg %p109
      %p164 = pneg %p106
      %p165 = scmp.lt.s32.totalorder %s15, 1
      %s166 = scalar_select %p165, %s15, 1
      %s167 = smul.addr %s166, 8
      %s168 = scalar_lea.vmem %s3, %s167
      %s169 = smul.u32 8, %s15
      %p170 = scmp.lt.s32.totalorder %s169, 15
      %s171 = scalar_select %p170, %s169, 15
      %s172 = smul.addr %s171, 4
      %s173 = scalar_lea.vmem %s0, %s172
      %s174 = smul.u32 8, %s15
      %s175 = smul.u32 8, %s15
      %p176 = scmp.lt.s32.totalorder %s175, 15
      %s177 = scalar_select %p176, %s175, 15
      %s178 = smul.addr %s177, 8
      %s179 = scalar_lea.vmem %s2, %s178
      %s180 = smul.u32 8, %s15
      %p181 = scmp.lt.s32.totalorder %s15, 1
      %s182 = scalar_select %p181, %s15, 1
      %s183 = smul.addr %s182, 8
      %s184 = scalar_lea.vmem %s3, %s183
      %v186 = vld [vmem:[%s173] sm:$0xf]
      %v187 = vld [vmem:[%s173 + $0x4] sm:$0xf]
      %v188 = vld [vmem:[%s173 + $0x8] sm:$0xf]
      %v189 = vld [vmem:[%s173 + $0xc] sm:$0xf]
      %v190 = vld [vmem:[%s173 + $0x10] sm:$0xf]
      %v191 = vld [vmem:[%s173 + $0x14] sm:$0xf]
      %v192 = vld [vmem:[%s173 + $0x18] sm:$0xf]
      %v193 = vld [vmem:[%s173 + $0x1c] sm:$0xf]
      %v194 = vld [vmem:[%s1] sm:$0xf]
      %v195 = vld [vmem:[%s1 + $0x4] sm:$0xf]
      %v196 = vld [vmem:[%s1 + $0x8] sm:$0xf]
      %v197 = vld [vmem:[%s1 + $0xc] sm:$0xf]
      %v198 = vld [vmem:[%s1 + $0x10] sm:$0xf]
      %v199 = vld [vmem:[%s1 + $0x14] sm:$0xf]
      %v200 = vld [vmem:[%s1 + $0x18] sm:$0xf]
      %v201 = vld [vmem:[%s1 + $0x1c] sm:$0xf]
      %v210 = vunpack.c.l.b16 %v186
      %v211 = vunpack.c.l.b16 %v187
      %v212 = vunpack.c.l.b16 %v188
      %v213 = vunpack.c.l.b16 %v189
      %v214 = vunpack.c.l.b16 %v190
      %v215 = vunpack.c.l.b16 %v191
      %v216 = vunpack.c.l.b16 %v192
      %v217 = vunpack.c.l.b16 %v193
      %v218 = vpack.c.b16 %v211, %v210
      %v219 = vpack.c.b16 %v213, %v212
      %v220 = vpack.c.b16 %v215, %v214
      %v221 = vpack.c.b16 %v217, %v216
      %v230 = vunpack.c.l.b16 %v194
      %v231 = vunpack.c.l.b16 %v195
      %v232 = vunpack.c.l.b16 %v196
      %v233 = vunpack.c.l.b16 %v197
      %v234 = vunpack.c.l.b16 %v198
      %v235 = vunpack.c.l.b16 %v199
      %v236 = vunpack.c.l.b16 %v200
      %v237 = vunpack.c.l.b16 %v201
      %v238 = vpack.c.b16 %v231, %v230
      %v239 = vpack.c.b16 %v233, %v232
      %v240 = vpack.c.b16 %v235, %v234
      %v241 = vpack.c.b16 %v237, %v236
      %vm246 = vcmask 523264
      %v248 = vsel %vm246, %v218, 0
      %v251 = vsel %vm246, %v219, 0
      %v254 = vsel %vm246, %v220, 0
      %v257 = vsel %vm246, %v221, 0
      %259 = vmatprep.subr.bf16.mxu0 0
      %260 = vmatpush1.bf16.msra.mxu0 %v238
      %261 = vmatprep.subr.bf16.mxu0 0
      %262 = vmatpush1.bf16.msra.mxu0 %v239
      %263 = vmatprep.subr.bf16.mxu0 0
      %264 = vmatpush1.bf16.msra.mxu0 %v240
      %265 = vmatprep.subr.bf16.mxu0 0
      %266 = vmatpush1.bf16.msra.mxu0 %v241
      %267 = vmatprep.subr.bf16.mxu0 0
      %268 = vmatpush1.bf16.msra.mxu0 0
      %269 = vmatprep.subr.bf16.mxu0 0
      %270 = vmatpush1.bf16.msra.mxu0 0
      %271 = vmatprep.subr.bf16.mxu0 0
      %272 = vmatpush1.bf16.msra.mxu0 0
      %273 = vmatprep.subr.bf16.mxu0 0
      %274 = vmatpush1.bf16.msra.mxu0 0
      %275 = vmatprep.subr.bf16.mxu0 0
      %276 = vmatpush1.bf16.msra.mxu0 0
      %277 = vmatprep.subr.bf16.mxu0 0
      %278 = vmatpush1.bf16.msra.mxu0 0
      %279 = vmatprep.subr.bf16.mxu0 0
      %280 = vmatpush1.bf16.msra.mxu0 0
      %281 = vmatprep.subr.bf16.mxu0 0
      %282 = vmatpush1.bf16.msra.mxu0 0
      %283 = vmatprep.subr.bf16.mxu0 0
      %284 = vmatpush1.bf16.msra.mxu0 0
      %285 = vmatprep.subr.bf16.mxu0 0
      %286 = vmatpush1.bf16.msra.mxu0 0
      %287 = vmatprep.subr.bf16.mxu0 0
      %288 = vmatpush1.bf16.msra.mxu0 0
      %289 = vmatprep.subr.bf16.mxu0 0
      %290 = vmatpush1.bf16.msra.mxu0 0
      %291 = vmatprep.mubr.bf16.mxu0 0
      %292 = vmatmul.mubr.bf16.gmra.mrb[0].mxu0 %v248
      %v293 = vpop.f32.mrb[0].mxu0
      %v294 = vadd.f32 0.0, %v293
      %v295 = vpop.f32.mrb[0].mxu0
      %v296 = vpop.f32.mrb[0].mxu0
      %v297 = vadd.f32 0.0, %v296
      %v298 = vpop.f32.mrb[0].mxu0
      %299 = vmatprep.mubr.bf16.mxu0 0
      %300 = vmatmul.mubr.bf16.gmra.mrb[0].mxu0 %v251
      %v301 = vpop.f32.mrb[0].mxu0
      %v302 = vadd.f32 0.0, %v301
      %v303 = vpop.f32.mrb[0].mxu0
      %v304 = vpop.f32.mrb[0].mxu0
      %v305 = vadd.f32 0.0, %v304
      %v306 = vpop.f32.mrb[0].mxu0
      %307 = vmatprep.mubr.bf16.mxu0 0
      %308 = vmatmul.mubr.bf16.gmra.mrb[0].mxu0 %v254
      %v309 = vpop.f32.mrb[0].mxu0
      %v310 = vadd.f32 0.0, %v309
      %v311 = vpop.f32.mrb[0].mxu0
      %v312 = vpop.f32.mrb[0].mxu0
      %v313 = vadd.f32 0.0, %v312
      %v314 = vpop.f32.mrb[0].mxu0
      %315 = vmatprep.mubr.bf16.mxu0 0
      %316 = vmatmul.mubr.bf16.gmra.mrb[0].mxu0 %v257
      %v317 = vpop.f32.mrb[0].mxu0
      %v318 = vadd.f32 0.0, %v317
      %v319 = vpop.f32.mrb[0].mxu0
      %v320 = vpop.f32.mrb[0].mxu0
      %v321 = vadd.f32 0.0, %v320
      %v322 = vpop.f32.mrb[0].mxu0
      %323 = vdwg.mxu0
      %324 = vst [vmem:[%s179] sm:$0xff] %v294
      %325 = vst [vmem:[%s179 + $0x8] sm:$0xff] %v297
      %326 = vst [vmem:[%s179 + $0x10] sm:$0xff] %v302
      %327 = vst [vmem:[%s179 + $0x18] sm:$0xff] %v305
      %328 = vst [vmem:[%s179 + $0x20] sm:$0xff] %v310
      %329 = vst [vmem:[%s179 + $0x28] sm:$0xff] %v313
      %330 = vst [vmem:[%s179 + $0x30] sm:$0xff] %v318
      %331 = vst [vmem:[%s179 + $0x38] sm:$0xff] %v321
      %v332 = vadd.f32 %v294, %v297
      %v333 = vadd.f32 %v332, %v302
      %v334 = vadd.f32 %v333, %v305
      %v335 = vadd.f32 %v334, %v310
      %v336 = vadd.f32 %v335, %v313
      %v337 = vadd.f32 %v336, %v318
      %v338 = vadd.f32 %v337, %v321
      %v339 = vrot.slane %v338, 4
      %v340 = vadd.f32 %v338, %v339
      %v341 = vrot.slane %v340, 2
      %v342 = vadd.f32 %v340, %v341
      %v343 = vrot.slane %v342, 1
      %v344 = vadd.f32 %v342, %v343
      %345 = vst [vmem:[%s184] sm:$0x1] %v344
      %v346 = vmul.f32 %v294, %v294
      %v347 = vmul.f32 %v297, %v297
      %v348 = vmul.f32 %v302, %v302
      %v349 = vmul.f32 %v305, %v305
      %v350 = vmul.f32 %v310, %v310
      %v351 = vmul.f32 %v313, %v313
      %v352 = vmul.f32 %v318, %v318
      %v353 = vmul.f32 %v321, %v321
      %v354 = vadd.f32 %v346, %v347
      %v355 = vadd.f32 %v354, %v348
      %v356 = vadd.f32 %v355, %v349
      %v357 = vadd.f32 %v356, %v350
      %v358 = vadd.f32 %v357, %v351
      %v359 = vadd.f32 %v358, %v352
      %v360 = vadd.f32 %v359, %v353
      %v361 = vrot.slane %v360, 4
      %v362 = vadd.f32 %v360, %v361
      %v363 = vrot.slane %v362, 2
      %v364 = vadd.f32 %v362, %v363
      %v365 = vrot.slane %v364, 1
      %v366 = vadd.f32 %v364, %v365
      %367 = vst [vmem:[%s184 + $0x1] sm:$0x1] %v366
      %s368 = smul.u32 8, %s15
      %p369 = scmp.lt.s32.totalorder %s368, 15
      %s370 = scalar_select %p369, %s368, 15
      %s371 = smul.addr %s370, 8
      %s372 = scalar_lea.vmem %s2, %s371
      %p373 = scmp.lt.s32.totalorder %s15, 1
      %s374 = scalar_select %p373, %s15, 1
      %s375 = smul.addr %s374, 8
      %s376 = scalar_lea.vmem %s3, %s375
      // Predicated region
      $region29: #{downsample_conv.2} parent=27 // pred_check
        %p377 = pneg %p80
      $region30: #{downsample_conv.2} parent=27 // pred_check_branch
        %379 = sbr.rel (%p377) target = $region32
      $region31: #{downsample_conv.2} parent=27 // pred_region
        %s380 = smul.u32 8, %s15
      $region32: #{downsample_conv.2} parent=27 // pred_fallthru
        _
      // Predicated region
      $region33: #{downsample_conv.2} parent=27 // pred_check
        %p381 = pneg %p106
      $region34: #{downsample_conv.2} parent=27 // pred_check_branch
        %383 = sbr.rel (%p381) target = $region36
      $region35: #{downsample_conv.2} parent=27 // pred_region
        _
      $region36: #{downsample_conv.2} parent=27 // pred_fallthru
        _
    $region28: #{downsample_conv.2} parent=5 // pred_fallthru
      _
    %p384 = scmp.le.s32.totalorder 2, %s10
    // Predicated region
    $region37: #{downsample_conv.2} parent=5 // pred_check
      %p385 = pneg %p384
    $region38: #{downsample_conv.2} parent=5 // pred_check_branch
      %387 = sbr.rel (%p385) target = $region40
    $region39: #{downsample_conv.2} parent=5 // pred_region
      %s388 = ssub.s32 %s10, 2
      // Predicated region
      $region41: #{downsample_conv.2} parent=39 // pred_check
        %p389 = pneg %p86
      $region42: #{downsample_conv.2} parent=39 // pred_check_branch
        %391 = sbr.rel (%p389) target = $region44
      $region43: #{downsample_conv.2} parent=39 // pred_region
        %s392 = smul.u32 8, %s16
        %p393 = scmp.lt.s32.totalorder %s392, 15
        %s394 = scalar_select %p393, %s392, 15
        %s395 = smul.addr %s394, 8
        %s396 = scalar_lea.vmem %s2, %s395
      $region44: #{downsample_conv.2} parent=39 // pred_fallthru
        _
      // Predicated region
      $region45: #{downsample_conv.2} parent=39 // pred_check
        %p397 = pneg %p112
      $region46: #{downsample_conv.2} parent=39 // pred_check_branch
        %399 = sbr.rel (%p397) target = $region48
      $region47: #{downsample_conv.2} parent=39 // pred_region
        %p400 = scmp.lt.s32.totalorder %s16, 1
        %s401 = scalar_select %p400, %s16, 1
        %s402 = smul.addr %s401, 8
        %s403 = scalar_lea.vmem %s3, %s402
      $region48: #{downsample_conv.2} parent=39 // pred_fallthru
        _
    $region40: #{downsample_conv.2} parent=5 // pred_fallthru
      _
  $region6: #{downsample_conv.2} parent=0 // loop_footer
    %s14 = sadd.s32 1, %s10
  $region7: #{downsample_conv.2} parent=0 // loop_footer_branch
    %9 = sbr.rel target = $region3
  $region8: #{downsample_conv.2} parent=0 // loop_exit
    _

</llo_original>
